<compile_context>
chip_gen: v7x
topology: tpu7x:2x2x1
jax: 0.10.0
libtpu: 0.0.40
codegen_flags: <defaults>
</compile_context>

<pallas_src>
import functools

import jax
import jax.numpy as jnp
from jax import lax
from jax.experimental import pallas as pl
from jax.experimental.pallas import tpu as pltpu


# ---------------------------------------------------------------------------
# Pallas kernel: per (batch, entity-type) projection + RoPE + fused q.k^T
# ---------------------------------------------------------------------------
def _global_attention_kernel(x_ref, w_ref, b_ref, cos_ref, sin_ref, out_ref,
                             *, D, scale):
    """One (batch, type) pair per grid step.

    x_ref   : [1, S, H]   hidden states (compute dtype: f32 or bf16)
    w_ref   : [1, H, 2D]  per-type dense weight, columns = [qe|qo|ke|ko]
    b_ref   : [1, 1, 2D]  per-type dense bias (same column order, f32)
    cos_ref : [S, D]      [cos | cos]
    sin_ref : [S, D]      [-sin | sin]   (sign pre-folded)
    out_ref : [1, 1, S, S] logits for this (batch, type)
    """
    D2 = D // 2
    x = x_ref[0]                                   # [S, H]
    w = w_ref[0]                                   # [H, 2D]

    # Projection for this (batch, type); f32 accumulation on the MXU.
    proj = jnp.dot(x, w, preferred_element_type=jnp.float32) + b_ref[0]  # [S,2D]

    cos = cos_ref[...]                             # [S, D]
    sin = sin_ref[...]                             # [S, D]

    def rot_half(v):
        # [a | b] -> [b | a]: static lane rotation (XLU); == pltpu.roll(v, D2, -1)
        return jnp.concatenate([v[:, D2:], v[:, :D2]], axis=-1)

    q = proj[:, :D]                                # [qe | qo]
    k = proj[:, D:]                                # [ke | ko]
    # rotate-half RoPE on full D-wide slabs (pure VPU work, f32):
    #   q_rot = [qe*cos - qo*sin | qo*cos + qe*sin] = [qre | qro]
    q_rot = (q * cos + rot_half(q) * sin) * scale  # fold 1/sqrt(D) into q side
    k_rot = k * cos + rot_half(k) * sin

    mm_dtype = x_ref.dtype                         # bf16 fast path on v6e/v7x
    logits = lax.dot_general(
        q_rot.astype(mm_dtype), k_rot.astype(mm_dtype),
        dimension_numbers=(((1,), (1,)), ((), ())),      # contract last dims
        preferred_element_type=jnp.float32)        # [S, S], single K=D matmul
    out_ref[0, 0] = logits.astype(out_ref.dtype)


# ---------------------------------------------------------------------------
# Wrapper: parameter re-layout, RoPE tables, pallas_call, final transpose
# ---------------------------------------------------------------------------
def global_attention(hidden, W, b, *, ent_type_size, inner_dim,
                     compute_dtype=jnp.float32):
    """hidden: [B, S, H]; W: [T*2D, H] (torch nn.Linear layout); b: [T*2D].

    compute_dtype: dtype of the matmul operands (jnp.float32, or jnp.bfloat16
    on v6e/v7x for ~2x MXU throughput and halved DMA bytes); accumulation and
    RoPE math are always f32.
    """
    B, S, H = hidden.shape
    T, D = ent_type_size, inner_dim
    D2 = D // 2
    N = 2 * D

    # Permute dense output features so each type's chunk is
    # [q_even | q_odd | k_even | k_odd] (pure parameter re-layout, no math).
    perm = []
    for t in range(T):
        base = t * N
        perm += list(range(base, base + D, 2))               # q even
        perm += list(range(base + 1, base + D, 2))           # q odd
        perm += list(range(base + D, base + N, 2))           # k even
        perm += list(range(base + D + 1, base + N, 2))       # k odd
    perm = jnp.asarray(perm, dtype=jnp.int32)

    Wp = jnp.transpose(W[perm, :].reshape(T, N, H), (0, 2, 1))  # [T, H, 2D]
    bp = b[perm].reshape(T, 1, N).astype(jnp.float32)           # [T, 1, 2D]

    x = hidden.astype(compute_dtype)
    Wp = Wp.astype(compute_dtype)

    # RoPE tables, pre-tiled to [S, D]; theta_i = 10000^(-2i/D).
    pos = jnp.arange(S, dtype=jnp.float32)[:, None]             # [S, 1]
    idx = jnp.arange(D2, dtype=jnp.float32)
    theta = jnp.power(10000.0, -2.0 * idx / D)                  # [D2]
    ang = pos * theta                                           # [S, D2]
    cos_tab = jnp.concatenate([jnp.cos(ang), jnp.cos(ang)], axis=1)   # [S, D]
    sin_tab = jnp.concatenate([-jnp.sin(ang), jnp.sin(ang)], axis=1)  # [S, D]

    out = pl.pallas_call(
        functools.partial(_global_attention_kernel, D=D, scale=1.0 / (D ** 0.5)),
        out_shape=jax.ShapeDtypeStruct((B, T, S, S), jnp.float32),
        grid=(B, T),                                   # T innermost: x block
        in_specs=[                                     # is reused across types
            pl.BlockSpec((1, S, H), lambda bi, ti: (bi, 0, 0)),   # x
            pl.BlockSpec((1, H, N), lambda bi, ti: (ti, 0, 0)),   # W (per type)
            pl.BlockSpec((1, 1, N), lambda bi, ti: (ti, 0, 0)),   # bias
            pl.BlockSpec((S, D), lambda bi, ti: (0, 0)),          # cos
            pl.BlockSpec((S, D), lambda bi, ti: (0, 0)),          # sin
        ],
        out_specs=pl.BlockSpec((1, 1, S, S), lambda bi, ti: (bi, ti, 0, 0)),
        compiler_params=pltpu.CompilerParams(
            dimension_semantics=("parallel", "parallel")),
    )(x, Wp, bp, cos_tab, sin_tab)

    # [B, T, S, S] -> [B, S(m), S(n), T(h)]  == torch einsum 'bmhd,bnhd->bmnh'.
    # Kept in XLA; consumers that accept [B, T, S, S] should drop it entirely.
    return jnp.transpose(out, (0, 2, 3, 1))


# ---------------------------------------------------------------------------
# Pure-JAX reference mirroring the PyTorch forward exactly (for verification)
# ---------------------------------------------------------------------------
def reference(hidden, W, b, *, ent_type_size, inner_dim):
    B, S, H = hidden.shape
    T, D = ent_type_size, inner_dim
    out = hidden @ W.T + b                                 # [B, S, T*2D]
    out = out.reshape(B, S, T, 2 * D)
    qw, kw = out[..., :D], out[..., D:]

    pos = jnp.arange(S, dtype=jnp.float32)[:, None]
    idx = jnp.arange(D // 2, dtype=jnp.float32)
    theta = jnp.power(10000.0, -2.0 * idx / D)
    emb = pos * theta                                      # [S, D/2]
    pos_emb = jnp.stack([jnp.sin(emb), jnp.cos(emb)], -1).reshape(S, D)
    cos_pos = jnp.repeat(pos_emb[None, :, None, 1::2], 2, axis=-1)
    sin_pos = jnp.repeat(pos_emb[None, :, None, ::2], 2, axis=-1)

    qw2 = jnp.stack([-qw[..., 1::2], qw[..., ::2]], -1).reshape(qw.shape)
    qw_r = qw * cos_pos + qw2 * sin_pos
    kw2 = jnp.stack([-kw[..., 1::2], kw[..., ::2]], -1).reshape(kw.shape)
    kw_r = kw * cos_pos + kw2 * sin_pos

    return jnp.einsum('bmhd,bnhd->bmnh', qw_r, kw_r) / (D ** 0.5)


if __name__ == "__main__":
    B, S, H = 2, 16, 32          # batch, seq_len, hidden_size
    T, D = 3, 64                 # ent_type_size, inner_dim

    key = jax.random.PRNGKey(0)
    k1, k2, k3 = jax.random.split(key, 3)

    # Synthetic encoder output: sum of the "last 4 hidden states".
    hidden_states = jax.random.normal(k1, (4, B, S, H), dtype=jnp.float32)
    last_hidden_state = jnp.sum(hidden_states, axis=0)     # [B, S, H]

    # Deterministic dense parameters (torch nn.Linear layout: [out, in]).
    W = jax.random.normal(k2, (T * 2 * D, H), dtype=jnp.float32) * 0.05
    b = jax.random.normal(k3, (T * 2 * D,), dtype=jnp.float32) * 0.01

    ref = reference(last_hidden_state, W, b, ent_type_size=T, inner_dim=D)

    # f32 path: exact check against the PyTorch-equivalent reference.
    logits = global_attention(last_hidden_state, W, b,
                              ent_type_size=T, inner_dim=D)
    logits = jax.block_until_ready(logits)
    assert logits.shape == (B, S, S, T)
    assert jnp.allclose(logits, ref, atol=1e-3, rtol=1e-3), "f32 mismatch vs reference"

    # bf16 fast path (recommended on v6e/v7x): matmul operands in bf16,
    # f32 accumulation & RoPE — loose tolerance per the relaxed-precision path.
    logits_bf16 = global_attention(last_hidden_state, W, b,
                                   ent_type_size=T, inner_dim=D,
                                   compute_dtype=jnp.bfloat16)
    logits_bf16 = jax.block_until_ready(logits_bf16)
    assert logits_bf16.shape == (B, S, S, T)
    assert jnp.allclose(logits_bf16, ref, atol=1e-1, rtol=1e-1), "bf16 mismatch vs reference"

    print("KERNEL_OK")
</pallas_src>

<mosaic_0001>
module attributes {stable_mosaic.version = 11 : i64} {
  func.func @_global_attention_kernel(%arg0: i32, %arg1: i32, %arg2: memref<1x16x32xf32, #tpu.memory_space<vmem>>, %arg3: memref<1x32x128xf32, #tpu.memory_space<vmem>>, %arg4: memref<1x1x128xf32, #tpu.memory_space<vmem>>, %arg5: memref<16x64xf32, #tpu.memory_space<vmem>>, %arg6: memref<16x64xf32, #tpu.memory_space<vmem>>, %arg7: memref<1x1x16x16xf32, #tpu.memory_space<vmem>>) attributes {dimension_semantics = [#tpu.dimension_semantics<parallel>, #tpu.dimension_semantics<parallel>], iteration_bounds = array<i64: 2, 3>, scalar_prefetch = 0 : i64, scratch_operands = 0 : i64, tpu.core_type = #tpu.core_type<tc>, window_params = [{transform_indices = @transform_0, window_bounds = array<i64: 1, 16, 32>}, {transform_indices = @transform_1, window_bounds = array<i64: 1, 32, 128>}, {transform_indices = @transform_2, window_bounds = array<i64: 1, 1, 128>}, {pipeline_mode = #tpu.pipeline_mode<synchronous>, transform_indices = @transform_3, window_bounds = array<i64: 16, 64>}, {pipeline_mode = #tpu.pipeline_mode<synchronous>, transform_indices = @transform_4, window_bounds = array<i64: 16, 64>}, {transform_indices = @transform_5, window_bounds = array<i64: 1, 1, 16, 16>}]} {
    %c0 = arith.constant 0 : index
    %c0_0 = arith.constant 0 : index
    %c0_1 = arith.constant 0 : index
    %0 = vector.load %arg2[%c0, %c0_0, %c0_1] : memref<1x16x32xf32, #tpu.memory_space<vmem>>, vector<1x16x32xf32>
    %1 = vector.shape_cast %0 : vector<1x16x32xf32> to vector<16x32xf32>
    %c0_2 = arith.constant 0 : index
    %c0_3 = arith.constant 0 : index
    %c0_4 = arith.constant 0 : index
    %2 = vector.load %arg3[%c0_2, %c0_3, %c0_4] : memref<1x32x128xf32, #tpu.memory_space<vmem>>, vector<1x32x128xf32>
    %3 = vector.shape_cast %2 : vector<1x32x128xf32> to vector<32x128xf32>
    %cst = arith.constant dense<0.000000e+00> : vector<16x128xf32>
    %4 = tpu.matmul %1, %3, %cst {dimension_numbers = #tpu.dot_dimension_numbers<[1], [0], [0], [1], [0, 0, 1, 1], [], []>} : vector<16x32xf32>, vector<32x128xf32>, vector<16x128xf32> -> vector<16x128xf32>
    %c0_5 = arith.constant 0 : index
    %c0_6 = arith.constant 0 : index
    %c0_7 = arith.constant 0 : index
    %5 = vector.load %arg4[%c0_5, %c0_6, %c0_7] : memref<1x1x128xf32, #tpu.memory_space<vmem>>, vector<1x1x128xf32>
    %6 = vector.shape_cast %5 : vector<1x1x128xf32> to vector<1x128xf32>
    %7 = vector.broadcast %6 : vector<1x128xf32> to vector<16x128xf32>
    %8 = arith.addf %4, %7 : vector<16x128xf32>
    %c0_8 = arith.constant 0 : index
    %c0_9 = arith.constant 0 : index
    %9 = vector.load %arg5[%c0_8, %c0_9] : memref<16x64xf32, #tpu.memory_space<vmem>>, vector<16x64xf32>
    %c0_10 = arith.constant 0 : index
    %c0_11 = arith.constant 0 : index
    %10 = vector.load %arg6[%c0_10, %c0_11] : memref<16x64xf32, #tpu.memory_space<vmem>>, vector<16x64xf32>
    %11 = vector.extract_strided_slice %8 {offsets = [0, 0], sizes = [16, 64], strides = [1, 1]} : vector<16x128xf32> to vector<16x64xf32>
    %12 = vector.extract_strided_slice %8 {offsets = [0, 64], sizes = [16, 64], strides = [1, 1]} : vector<16x128xf32> to vector<16x64xf32>
    %13 = arith.mulf %11, %9 : vector<16x64xf32>
    %14 = vector.extract_strided_slice %11 {offsets = [0, 32], sizes = [16, 32], strides = [1, 1]} : vector<16x64xf32> to vector<16x32xf32>
    %15 = vector.extract_strided_slice %11 {offsets = [0, 0], sizes = [16, 32], strides = [1, 1]} : vector<16x64xf32> to vector<16x32xf32>
    %16 = tpu.concatenate %14, %15 in 1 : vector<16x32xf32>, vector<16x32xf32> -> vector<16x64xf32>
    %17 = arith.mulf %16, %10 : vector<16x64xf32>
    %18 = arith.addf %13, %17 : vector<16x64xf32>
    %cst_12 = arith.constant 1.250000e-01 : f32
    %19 = vector.broadcast %cst_12 : f32 to vector<16x64xf32>
    %20 = arith.mulf %18, %19 : vector<16x64xf32>
    %21 = arith.mulf %12, %9 : vector<16x64xf32>
    %22 = vector.extract_strided_slice %12 {offsets = [0, 32], sizes = [16, 32], strides = [1, 1]} : vector<16x64xf32> to vector<16x32xf32>
    %23 = vector.extract_strided_slice %12 {offsets = [0, 0], sizes = [16, 32], strides = [1, 1]} : vector<16x64xf32> to vector<16x32xf32>
    %24 = tpu.concatenate %22, %23 in 1 : vector<16x32xf32>, vector<16x32xf32> -> vector<16x64xf32>
    %25 = arith.mulf %24, %10 : vector<16x64xf32>
    %26 = arith.addf %21, %25 : vector<16x64xf32>
    %cst_13 = arith.constant dense<0.000000e+00> : vector<16x16xf32>
    %27 = tpu.matmul %20, %26, %cst_13 {dimension_numbers = #tpu.dot_dimension_numbers<[1], [1], [0], [0], [0, 0, 1, 0], [], []>} : vector<16x64xf32>, vector<16x64xf32>, vector<16x16xf32> -> vector<16x16xf32>
    %c0_14 = arith.constant 0 : index
    %c0_15 = arith.constant 0 : index
    %c0_16 = arith.constant 0 : index
    %c0_17 = arith.constant 0 : index
    %28 = vector.load %arg7[%c0_14, %c0_15, %c0_16, %c0_17] : memref<1x1x16x16xf32, #tpu.memory_space<vmem>>, vector<1x1x16x16xf32>
    %29 = vector.shape_cast %28 : vector<1x1x16x16xf32> to vector<16x16xf32>
    %30 = vector.shape_cast %27 : vector<16x16xf32> to vector<1x1x16x16xf32>
    tpu.vector_store %arg7[%c0_14, %c0_15, %c0_16, %c0_17], %30 {strides = array<i32>} : memref<1x1x16x16xf32, #tpu.memory_space<vmem>>, vector<1x1x16x16xf32>,
    return
  }
  func.func @transform_0(%arg0: i32, %arg1: i32) -> (i32, i32, i32) {
    %c0_i32 = arith.constant 0 : i32
    %c0_i32_0 = arith.constant 0 : i32
    %c0_i32_1 = arith.constant 0 : i32
    return %arg0, %c0_i32, %c0_i32_0 : i32, i32, i32
  }
  func.func @transform_1(%arg0: i32, %arg1: i32) -> (i32, i32, i32) {
    %c0_i32 = arith.constant 0 : i32
    %c0_i32_0 = arith.constant 0 : i32
    %c0_i32_1 = arith.constant 0 : i32
    return %arg1, %c0_i32, %c0_i32_0 : i32, i32, i32
  }
  func.func @transform_2(%arg0: i32, %arg1: i32) -> (i32, i32, i32) {
    %c0_i32 = arith.constant 0 : i32
    %c0_i32_0 = arith.constant 0 : i32
    %c0_i32_1 = arith.constant 0 : i32
    return %arg1, %c0_i32, %c0_i32_0 : i32, i32, i32
  }
  func.func @transform_3(%arg0: i32, %arg1: i32) -> (i32, i32) {
    %c0_i32 = arith.constant 0 : i32
    %c0_i32_0 = arith.constant 0 : i32
    %c0_i32_1 = arith.constant 0 : i32
    return %c0_i32, %c0_i32_0 : i32, i32
  }
  func.func @transform_4(%arg0: i32, %arg1: i32) -> (i32, i32) {
    %c0_i32 = arith.constant 0 : i32
    %c0_i32_0 = arith.constant 0 : i32
    %c0_i32_1 = arith.constant 0 : i32
    return %c0_i32, %c0_i32_0 : i32, i32
  }
  func.func @transform_5(%arg0: i32, %arg1: i32) -> (i32, i32, i32, i32) {
    %c0_i32 = arith.constant 0 : i32
    %c0_i32_0 = arith.constant 0 : i32
    %c0_i32_1 = arith.constant 0 : i32
    return %arg0, %arg1, %c0_i32, %c0_i32_0 : i32, i32, i32, i32
  }
}

</mosaic_0001>

<llo_original>
// kernel: tpu_custom_call.1
$region0: #{tpu_custom_call.1}
  #allocation0 [shape = 'u32[]', space=smem, size = 0x4, offset = 0x4, fixed_abs, tag = 'smem constant byte address 0x4 - core index']
  #allocation1 [shape = 'u32[144,128]{1,0:T(1,128)}', space=vmem, size = 0x12000, scoped, tag = 'internal scratch']
  %s0 = inlined_call_operand.hbm [shape: f32[2,16,32], index: 0, kind: input, shape index: {}]
  %s1 = inlined_call_operand.hbm [shape: f32[3,32,128], index: 1, kind: input, shape index: {}]
  %s2 = inlined_call_operand.vmem [shape: f32[3,1,128], index: 2, kind: input, shape index: {}]
  %s3 = inlined_call_operand.hbm [shape: f32[16,64], index: 3, kind: input, shape index: {}]
  %s4 = inlined_call_operand.hbm [shape: f32[16,64], index: 4, kind: input, shape index: {}]
  %s5 = inlined_call_operand.hbm [shape: f32[2,3,16,16], index: 5, kind: output, shape index: {}]
  %s6 = sld [smem:[#allocation0]]
  $region69: #{tpu_custom_call.1} parent=0
    _
  %s8 = ssub.s32 1, %s6
  %s9 = scalar_select 0, %s8, %s6
  $region1: #{tpu_custom_call.1} parent=0
    #allocation2 [shape = 'u8[16384]{0}', space=vmem, size = 0x4000, scoped, tag = 'input window, operand 0']
    #allocation3 [shape = 's32[2]{0}', space=sflag, size = 0x8, scoped, tag = 'scoped memory for tpu_custom_call.1']
    #allocation4 [shape = 's32[2]{0}', space=sflag, size = 0x8, scoped, tag = 'scoped memory for tpu_custom_call.1']
    #allocation5 [shape = 'u8[32768]{0}', space=vmem, size = 0x8000, scoped, tag = 'input window, operand 1']
    #allocation6 [shape = 's32[2]{0}', space=sflag, size = 0x8, scoped, tag = 'scoped memory for tpu_custom_call.1']
    #allocation7 [shape = 'u8[8192]{0}', space=vmem, size = 0x2000, scoped, tag = 'input window, operand 3, single buffered']
    #allocation8 [shape = 'u8[8192]{0}', space=vmem, size = 0x2000, scoped, tag = 'input window, operand 4, single buffered']
    #allocation9 [shape = 's32[1]{0}', space=sflag, size = 0x4, scoped, tag = 'scoped memory for tpu_custom_call.1']
    #allocation10 [shape = 'u8[16384]{0}', space=vmem, size = 0x4000, scoped, tag = 'output window, operand 0']
    %10 = vsyncpa [#allocation3], 0
    %s11 = scalar_lea.sflag [#allocation3], 1
    %12 = vsyncpa %s11, 0
    %13 = vsyncpa [#allocation6], 0
    %s14 = scalar_lea.sflag [#allocation6], 1
    %15 = vsyncpa %s14, 0
    %16 = vsyncpa [#allocation9], 0
    %17 = vsyncpa [#allocation4], 0
    %s18 = scalar_lea.sflag [#allocation4], 1
    %19 = vsyncpa %s18, 0
    loop: start=0, step=1, limit=8
    $region2: #{tpu_custom_call.1} parent=1 // loop_pre_header
      _
    $region3: #{tpu_custom_call.1} parent=1 // loop_header
      %s21 = sphi 0, %s25
      %p22 = scmp.ge.s32.totalorder %s21, 8
      %s28 = sphi 0, %s40
      %s29 = sphi 0, %s36
      %s30 = sphi 0, %s28
      %s31 = sphi 0, %s29
      %s32 = sphi 0, %s30
      %s33 = sphi 0, %s31
      %s43 = sphi 0, %s45
      %s46 = sphi 0, %s43
      %s47 = sphi 0, %s46
      %s63 = sphi 0, %s47
      %s69 = sphi 0, %s71
      %s72 = sphi 0, %s69
      %s73 = sphi 0, %s72
      %s89 = sphi 0, %s73
      %s95 = sphi 0, %s97
      %s98 = sphi 0, %s95
      %s99 = sphi 0, %s98
      %s115 = sphi 0, %s99
      %s119 = sphi 0, %s119
      %s121 = sphi 0, %s119
      %s122 = sphi 0, %s121
      %s136 = sphi 0, %s122
      %s140 = sphi 0, %s140
      %s142 = sphi 0, %s140
      %s143 = sphi 0, %s142
      %s157 = sphi 0, %s143
      %s165 = sphi 0, %s167
      %s168 = sphi 0, %s165
      %s169 = sphi 0, %s168
      %s185 = sphi 0, %s169
    $region4: #{tpu_custom_call.1} parent=1 // loop_header_branch
      %24 = sbr.rel (%p22) target = $region8
    $region5: #{tpu_custom_call.1} parent=1 // loop_body
      %s26 = ssub.s32 %s21, 1
      %s27 = ssub.s32 %s21, 2
      %s34 = sadd.s32 1, %s29
      %p35 = scmp.ge.s32.totalorder %s34, 3
      %s36 = scalar_select %p35, 0, %s34
      %s37 = sadd.s32 1, %s28
      %s38 = scalar_select %p35, %s37, %s28
      %p39 = scmp.ge.s32.totalorder %s38, 2
      %s40 = scalar_select %p39, 0, %s38
      %s41 = ssub.s32 %s28, %s40
      %p42 = scmp.eq.s32.totalorder %s41, 0
      %s44 = sadd.s32 %s43, 1
      %s45 = scalar_select %p42, %s43, %s44
      %p48 = pneg %p42
      %p49 = scmp.eq.s32.totalorder %s21, 5
      %p50 = por %p48, %p49
      %p51 = scmp.ne.s32.totalorder %s43, %s46
      %p52 = scmp.eq.s32.totalorder %s21, 0
      %p53 = por %p51, %p52
      %p54 = scmp.ne.s32.totalorder %s43, %s46
      %p55 = scmp.eq.s32.totalorder %s26, 5
      %p56 = por %p54, %p55
      %p57 = scmp.ne.s32.totalorder %s46, %s47
      %p58 = scmp.eq.s32.totalorder %s26, 0
      %p59 = por %p57, %p58
      %p60 = scmp.ne.s32.totalorder %s46, %s47
      %p61 = scmp.eq.s32.totalorder %s27, 5
      %p62 = por %p60, %p61
      %p64 = scmp.ne.s32.totalorder %s47, %s63
      %p65 = scmp.eq.s32.totalorder %s27, 0
      %p66 = por %p64, %p65
      %s67 = ssub.s32 %s29, %s36
      %p68 = scmp.eq.s32.totalorder %s67, 0
      %s70 = sadd.s32 %s69, 1
      %s71 = scalar_select %p68, %s69, %s70
      %p74 = pneg %p68
      %p75 = scmp.eq.s32.totalorder %s21, 5
      %p76 = por %p74, %p75
      %p77 = scmp.ne.s32.totalorder %s69, %s72
      %p78 = scmp.eq.s32.totalorder %s21, 0
      %p79 = por %p77, %p78
      %p80 = scmp.ne.s32.totalorder %s69, %s72
      %p81 = scmp.eq.s32.totalorder %s26, 5
      %p82 = por %p80, %p81
      %p83 = scmp.ne.s32.totalorder %s72, %s73
      %p84 = scmp.eq.s32.totalorder %s26, 0
      %p85 = por %p83, %p84
      %p86 = scmp.ne.s32.totalorder %s72, %s73
      %p87 = scmp.eq.s32.totalorder %s27, 5
      %p88 = por %p86, %p87
      %p90 = scmp.ne.s32.totalorder %s73, %s89
      %p91 = scmp.eq.s32.totalorder %s27, 0
      %p92 = por %p90, %p91
      %s93 = ssub.s32 %s29, %s36
      %p94 = scmp.eq.s32.totalorder %s93, 0
      %s96 = sadd.s32 %s95, 1
      %s97 = scalar_select %p94, %s95, %s96
      %p100 = pneg %p94
      %p101 = scmp.eq.s32.totalorder %s21, 5
      %p102 = por %p100, %p101
      %p103 = scmp.ne.s32.totalorder %s95, %s98
      %p104 = scmp.eq.s32.totalorder %s21, 0
      %p105 = por %p103, %p104
      %p106 = scmp.ne.s32.totalorder %s95, %s98
      %p107 = scmp.eq.s32.totalorder %s26, 5
      %p108 = por %p106, %p107
      %p109 = scmp.ne.s32.totalorder %s98, %s99
      %p110 = scmp.eq.s32.totalorder %s26, 0
      %p111 = por %p109, %p110
      %p112 = scmp.ne.s32.totalorder %s98, %s99
      %p113 = scmp.eq.s32.totalorder %s27, 5
      %p114 = por %p112, %p113
      %p116 = scmp.ne.s32.totalorder %s99, %s115
      %p117 = scmp.eq.s32.totalorder %s27, 0
      %p118 = por %p116, %p117
      %s120 = sadd.s32 %s119, 1
      %p123 = scmp.eq.s32.totalorder %s21, 5
      %p124 = scmp.ne.s32.totalorder %s119, %s121
      %p125 = scmp.eq.s32.totalorder %s21, 0
      %p126 = por %p124, %p125
      %p127 = scmp.ne.s32.totalorder %s119, %s121
      %p128 = scmp.eq.s32.totalorder %s26, 5
      %p129 = por %p127, %p128
      %p130 = scmp.ne.s32.totalorder %s121, %s122
      %p131 = scmp.eq.s32.totalorder %s26, 0
      %p132 = por %p130, %p131
      %p133 = scmp.ne.s32.totalorder %s121, %s122
      %p134 = scmp.eq.s32.totalorder %s27, 5
      %p135 = por %p133, %p134
      %p137 = scmp.ne.s32.totalorder %s122, %s136
      %p138 = scmp.eq.s32.totalorder %s27, 0
      %p139 = por %p137, %p138
      %s141 = sadd.s32 %s140, 1
      %p144 = scmp.eq.s32.totalorder %s21, 5
      %p145 = scmp.ne.s32.totalorder %s140, %s142
      %p146 = scmp.eq.s32.totalorder %s21, 0
      %p147 = por %p145, %p146
      %p148 = scmp.ne.s32.totalorder %s140, %s142
      %p149 = scmp.eq.s32.totalorder %s26, 5
      %p150 = por %p148, %p149
      %p151 = scmp.ne.s32.totalorder %s142, %s143
      %p152 = scmp.eq.s32.totalorder %s26, 0
      %p153 = por %p151, %p152
      %p154 = scmp.ne.s32.totalorder %s142, %s143
      %p155 = scmp.eq.s32.totalorder %s27, 5
      %p156 = por %p154, %p155
      %p158 = scmp.ne.s32.totalorder %s143, %s157
      %p159 = scmp.eq.s32.totalorder %s27, 0
      %p160 = por %p158, %p159
      %s161 = ssub.s32 %s28, %s40
      %s162 = ssub.s32 %s29, %s36
      %s163 = sor.u32 %s161, %s162
      %p164 = scmp.eq.s32.totalorder %s163, 0
      %s166 = sadd.s32 %s165, 1
      %s167 = scalar_select %p164, %s165, %s166
      %p170 = pneg %p164
      %p171 = scmp.eq.s32.totalorder %s21, 5
      %p172 = por %p170, %p171
      %p173 = scmp.ne.s32.totalorder %s165, %s168
      %p174 = scmp.eq.s32.totalorder %s21, 0
      %p175 = por %p173, %p174
      %p176 = scmp.ne.s32.totalorder %s165, %s168
      %p177 = scmp.eq.s32.totalorder %s26, 5
      %p178 = por %p176, %p177
      %p179 = scmp.ne.s32.totalorder %s168, %s169
      %p180 = scmp.eq.s32.totalorder %s26, 0
      %p181 = por %p179, %p180
      %p182 = scmp.ne.s32.totalorder %s168, %s169
      %p183 = scmp.eq.s32.totalorder %s27, 5
      %p184 = por %p182, %p183
      %p186 = scmp.ne.s32.totalorder %s169, %s185
      %p187 = scmp.eq.s32.totalorder %s27, 0
      %p188 = por %p186, %p187
      %p189 = scmp.le.s32.totalorder 1, %s21
      %p190 = scmp.lt.s32.totalorder %s21, 7
      %p191 = pnand %p189, %p190
      %p192 = pneg %p191
      // Predicated region
      $region9: #{tpu_custom_call.1} parent=5 // pred_check
        _
      $region10: #{tpu_custom_call.1} parent=5 // pred_check_branch
        %194 = sbr.rel (%p191) target = $region12
      $region11: #{tpu_custom_call.1} parent=5 // pred_region
        %s195 = ssub.s32 %s21, 1
        // Predicated region
        $region13: #{tpu_custom_call.1} parent=11 // pred_check
          %p196 = pneg %p132
        $region14: #{tpu_custom_call.1} parent=11 // pred_check_branch
          %198 = sbr.rel (%p196) target = $region16
        $region15: #{tpu_custom_call.1} parent=11 // pred_region
          %s200 = ssub.s32 256, 256
          %201 = vsyncadd [#allocation6], %s200
          %s202 = sshll.u32 [#allocation7], 4
          %s203 = int_to_ptr.vmem [resolvable:$true] %s202
          %208 = dma.hbm_to_vmem [thread:$0]  %s3, 256, %s203, [#allocation6], 128, 128, 8
        $region16: #{tpu_custom_call.1} parent=11 // pred_fallthru
          _
        // Predicated region
        $region17: #{tpu_custom_call.1} parent=11 // pred_check
          %p209 = pneg %p153
        $region18: #{tpu_custom_call.1} parent=11 // pred_check_branch
          %211 = sbr.rel (%p209) target = $region20
        $region19: #{tpu_custom_call.1} parent=11 // pred_region
          %s213 = ssub.s32 256, 256
          %214 = vsyncadd [#allocation9], %s213
          %s215 = sshll.u32 [#allocation8], 4
          %s216 = int_to_ptr.vmem [resolvable:$true] %s215
          %221 = dma.hbm_to_vmem [thread:$0]  %s4, 256, %s216, [#allocation9], 128, 128, 8
        $region20: #{tpu_custom_call.1} parent=11 // pred_fallthru
          _
      $region12: #{tpu_custom_call.1} parent=5 // pred_fallthru
        _
      %p222 = scmp.lt.s32.totalorder %s21, 6
      // Predicated region
      $region21: #{tpu_custom_call.1} parent=5 // pred_check
        %p223 = pneg %p222
      $region22: #{tpu_custom_call.1} parent=5 // pred_check_branch
        %225 = sbr.rel (%p223) target = $region24
      $region23: #{tpu_custom_call.1} parent=5 // pred_region
        // Predicated region
        $region25: #{tpu_custom_call.1} parent=23 // pred_check
          %p226 = pneg %p53
        $region26: #{tpu_custom_call.1} parent=23 // pred_check_branch
          %228 = sbr.rel (%p226) target = $region28
        $region27: #{tpu_custom_call.1} parent=23 // pred_region
          %s229 = sand.u32 %s43, 1
          %s230 = scalar_lea.sflag [#allocation3], %s229
          %s231 = sand.u32 %s43, 1
          %s232 = smul.addr %s231, 16
          %s233 = scalar_lea.vmem [#allocation2], %s232
          %s235 = ssub.s32 256, 256
          %236 = vsyncadd %s230, %s235
          %s237 = smul.addr %s28, 2
          %s238 = smul.addr %s237, 128
          %s239 = scalar_lea.hbm %s0, %s238
          %s240 = sshll.u32 %s233, 4
          %s241 = int_to_ptr.vmem [resolvable:$true] %s240
          %246 = dma.hbm_to_vmem [thread:$0]  %s239, 256, %s241, %s230, 128, 128, 8
        $region28: #{tpu_custom_call.1} parent=23 // pred_fallthru
          _
        // Predicated region
        $region29: #{tpu_custom_call.1} parent=23 // pred_check
          %p247 = pneg %p79
        $region30: #{tpu_custom_call.1} parent=23 // pred_check_branch
          %249 = sbr.rel (%p247) target = $region32
        $region31: #{tpu_custom_call.1} parent=23 // pred_region
          %s250 = sand.u32 %s21, 1
          %s251 = scalar_lea.sflag [#allocation6], %s250
          %s252 = sand.u32 %s69, 1
          %s253 = smul.addr %s252, 32
          %s254 = scalar_lea.vmem [#allocation5], %s253
          %s256 = ssub.s32 512, 512
          %257 = vsyncadd %s251, %s256
          %s258 = smul.addr %s29, 4
          %s259 = smul.addr %s258, 128
          %s260 = scalar_lea.hbm %s1, %s259
          %s261 = sshll.u32 %s254, 4
          %s262 = int_to_ptr.vmem [resolvable:$true] %s261
          %267 = dma.hbm_to_vmem [thread:$0]  %s260, 512, %s262, %s251, 128, 128, 8
        $region32: #{tpu_custom_call.1} parent=23 // pred_fallthru
          _
        // Predicated region
        $region33: #{tpu_custom_call.1} parent=23 // pred_check
          %p268 = pneg %p105
        $region34: #{tpu_custom_call.1} parent=23 // pred_check_branch
          %270 = sbr.rel (%p268) target = $region36
        $region35: #{tpu_custom_call.1} parent=23 // pred_region
          %p271 = scmp.lt.s32.totalorder %s29, 2
          %s272 = scalar_select %p271, %s29, 2
          %s273 = scalar_lea.vmem %s2, %s272
        $region36: #{tpu_custom_call.1} parent=23 // pred_fallthru
          _
      $region24: #{tpu_custom_call.1} parent=5 // pred_fallthru
        _
      %p274 = scmp.le.s32.totalorder 1, %s21
      %p275 = scmp.lt.s32.totalorder %s21, 7
      %p276 = pnand %p274, %p275
      %p277 = pneg %p276
      // Predicated region
      $region37: #{tpu_custom_call.1} parent=5 // pred_check
        _
      $region38: #{tpu_custom_call.1} parent=5 // pred_check_branch
        %279 = sbr.rel (%p276) target = $region40
      $region39: #{tpu_custom_call.1} parent=5 // pred_region
        %s280 = ssub.s32 %s21, 1
        %s281 = sand.u32 %s46, 1
        %s282 = scalar_lea.sflag [#allocation3], %s281
        %s283 = sand.u32 %s46, 1
        %s284 = smul.addr %s283, 16
        %s285 = scalar_lea.vmem [#allocation2], %s284
        // Predicated region
        $region41: #{tpu_custom_call.1} parent=39 // pred_check
          %p286 = pneg %p59
        $region42: #{tpu_custom_call.1} parent=39 // pred_check_branch
          %288 = sbr.rel (%p286) target = $region44
        $region43: #{tpu_custom_call.1} parent=39 // pred_region
          %289 = dma.done %s282, 256
        $region44: #{tpu_custom_call.1} parent=39 // pred_fallthru
          _
        %s290 = sand.u32 %s26, 1
        %s291 = scalar_lea.sflag [#allocation6], %s290
        %s292 = sand.u32 %s72, 1
        %s293 = smul.addr %s292, 32
        %s294 = scalar_lea.vmem [#allocation5], %s293
        // Predicated region
        $region45: #{tpu_custom_call.1} parent=39 // pred_check
          %p295 = pneg %p85
        $region46: #{tpu_custom_call.1} parent=39 // pred_check_branch
          %297 = sbr.rel (%p295) target = $region48
        $region47: #{tpu_custom_call.1} parent=39 // pred_region
          %298 = dma.done %s291, 512
        $region48: #{tpu_custom_call.1} parent=39 // pred_fallthru
          _
        // Predicated region
        $region49: #{tpu_custom_call.1} parent=39 // pred_check
          %p299 = pneg %p132
        $region50: #{tpu_custom_call.1} parent=39 // pred_check_branch
          %301 = sbr.rel (%p299) target = $region52
        $region51: #{tpu_custom_call.1} parent=39 // pred_region
          %302 = dma.done [#allocation6], 256
        $region52: #{tpu_custom_call.1} parent=39 // pred_fallthru
          _
        // Predicated region
        $region53: #{tpu_custom_call.1} parent=39 // pred_check
          %p303 = pneg %p153
        $region54: #{tpu_custom_call.1} parent=39 // pred_check_branch
          %305 = sbr.rel (%p303) target = $region56
        $region55: #{tpu_custom_call.1} parent=39 // pred_region
          %306 = dma.done [#allocation9], 256
        $region56: #{tpu_custom_call.1} parent=39 // pred_fallthru
          _
        %s307 = sand.u32 %s46, 1
        %s308 = scalar_lea.sflag [#allocation3], %s307
        %s309 = sand.u32 %s46, 1
        %s310 = smul.addr %s309, 16
        %s311 = scalar_lea.vmem [#allocation2], %s310
        %p312 = pneg %p59
        %p313 = pneg %p56
        %s314 = sand.u32 %s26, 1
        %s315 = scalar_lea.sflag [#allocation6], %s314
        %s316 = sand.u32 %s72, 1
        %s317 = smul.addr %s316, 32
        %s318 = scalar_lea.vmem [#allocation5], %s317
        %p319 = pneg %p85
        %p320 = pneg %p82
        %p321 = scmp.lt.s32.totalorder %s31, 2
        %s322 = scalar_select %p321, %s31, 2
        %s323 = scalar_lea.vmem %s2, %s322
        %p324 = pneg %p111
        %p325 = pneg %p108
        %p326 = pneg %p132
        %p327 = pneg %p129
        %p328 = pneg %p153
        %p329 = pneg %p150
        %p330 = pneg %p181
        %p331 = pneg %p178
        %s332 = sand.u32 %s168, 1
        %s333 = scalar_lea.sflag [#allocation4], %s332
        %s334 = sand.u32 %s168, 1
        %s335 = smul.addr %s334, 16
        %s336 = scalar_lea.vmem [#allocation10], %s335
        %p337 = scmp.lt.s32.totalorder %s31, 2
        %s338 = scalar_select %p337, %s31, 2
        %s339 = scalar_lea.vmem %s2, %s338
        %v340 = vld [vmem:[%s285] sm:$0xff]
        %v341 = vld [vmem:[%s285 + $0x8] sm:$0xff]
        %v342 = vld [vmem:[%s294] sm:$0xff]
        %v343 = vld [vmem:[%s294 + $0x8] sm:$0xff]
        %v344 = vld [vmem:[%s294 + $0x10] sm:$0xff]
        %v345 = vld [vmem:[%s294 + $0x18] sm:$0xff]
        %v346 = vld [vmem:[%s339] sm:$0x1]
        %v348 = vlaneseq
        %v349 = vshrl.u32 %v348, 7
        %v350 = vsub.s32 0, %v349
        %v351 = vrot.slane %v346, %v350
        %vm353 = vcmask 261120
        %v355 = vsel %vm353, %v340, 0
        %v358 = vsel %vm353, %v341, 0
        %360 = vmatprep.subr.mxu0 0.0
        %361 = vmatpush1.msra.mxu0 %v342
        %362 = vmatprep.subr.mxu0 0.0
        %363 = vmatpush1.msra.mxu0 %v343
        %364 = vmatprep.subr.mxu0 0.0
        %365 = vmatpush1.msra.mxu0 %v344
        %366 = vmatprep.subr.mxu0 0.0
        %367 = vmatpush1.msra.mxu0 %v345
        %368 = vmatprep.subr.mxu0 0.0
        %369 = vmatpush1.msra.mxu0 0.0
        %370 = vmatprep.subr.mxu0 0.0
        %371 = vmatpush1.msra.mxu0 0.0
        %372 = vmatprep.subr.mxu0 0.0
        %373 = vmatpush1.msra.mxu0 0.0
        %374 = vmatprep.subr.mxu0 0.0
        %375 = vmatpush1.msra.mxu0 0.0
        %376 = vmatprep.subr.mxu0 0.0
        %377 = vmatpush1.msra.mxu0 0.0
        %378 = vmatprep.subr.mxu0 0.0
        %379 = vmatpush1.msra.mxu0 0.0
        %380 = vmatprep.subr.mxu0 0.0
        %381 = vmatpush1.msra.mxu0 0.0
        %382 = vmatprep.subr.mxu0 0.0
        %383 = vmatpush1.msra.mxu0 0.0
        %384 = vmatprep.subr.mxu0 0.0
        %385 = vmatpush1.msra.mxu0 0.0
        %386 = vmatprep.subr.mxu0 0.0
        %387 = vmatpush1.msra.mxu0 0.0
        %388 = vmatprep.subr.mxu0 0.0
        %389 = vmatpush1.msra.mxu0 0.0
        %390 = vmatprep.subr.mxu0 0.0
        %391 = vmatpush1.msra.mxu0 0.0
        %392 = vmatprep.subr.mxu0 0.0
        %393 = vmatpush1.msra.mxu0 0.0
        %394 = vmatprep.subr.mxu0 0.0
        %395 = vmatpush1.msra.mxu0 0.0
        %396 = vmatprep.subr.mxu0 0.0
        %397 = vmatpush1.msra.mxu0 0.0
        %398 = vmatprep.subr.mxu0 0.0
        %399 = vmatpush1.msra.mxu0 0.0
        %400 = vmatprep.subr.mxu0 0.0
        %401 = vmatpush1.msra.mxu0 0.0
        %402 = vmatprep.subr.mxu0 0.0
        %403 = vmatpush1.msra.mxu0 0.0
        %404 = vmatprep.subr.mxu0 0.0
        %405 = vmatpush1.msra.mxu0 0.0
        %406 = vmatprep.subr.mxu0 0.0
        %407 = vmatpush1.msra.mxu0 0.0
        %408 = vmatprep.subr.mxu0 0.0
        %409 = vmatpush1.msra.mxu0 0.0
        %410 = vmatprep.subr.mxu0 0.0
        %411 = vmatpush1.msra.mxu0 0.0
        %412 = vmatprep.subr.mxu0 0.0
        %413 = vmatpush1.msra.mxu0 0.0
        %414 = vmatprep.subr.mxu0 0.0
        %415 = vmatpush1.msra.mxu0 0.0
        %416 = vmatprep.subr.mxu0 0.0
        %417 = vmatpush1.msra.mxu0 0.0
        %418 = vmatprep.subr.mxu0 0.0
        %419 = vmatpush1.msra.mxu0 0.0
        %420 = vmatprep.subr.mxu0 0.0
        %421 = vmatpush1.msra.mxu0 0.0
        %422 = vmatprep.subr.mxu0 0.0
        %423 = vmatpush1.msra.mxu0 0.0
        %424 = vmatprep.mubr.f32.mxu0 0.0
        %425 = vmatmul.mubr.f32.gmra.mrb[0].mxu0 %v355
        %v426 = vpop.f32.mrb[0].mxu0
        %v427 = vadd.f32 %v351, %v426
        %v428 = vpop.f32.mrb[0].mxu0
        %429 = vmatprep.mubr.f32.mxu0 0.0
        %430 = vmatmul.mubr.f32.gmra.mrb[0].mxu0 %v358
        %v431 = vpop.f32.mrb[0].mxu0
        %v432 = vadd.f32 %v351, %v431
        %v433 = vpop.f32.mrb[0].mxu0
        %434 = vdwg.mxu0
        %v435 = vld [vmem:[#allocation7] sm:$0xff]
        %v436 = vld [vmem:[#allocation7 + $0x8] sm:$0xff]
        %v437 = vld [vmem:[#allocation8] sm:$0xff]
        %v438 = vld [vmem:[#allocation8 + $0x8] sm:$0xff]
        %v439 = vmul.f32 %v427, %v435
        %v440 = vmul.f32 %v432, %v436
        %443 = vrot.lane.b32.xlu0 %v427, 96
        %v444 = vpop.permute.xlu0 %443
        %445 = vrot.lane.b32.xlu0 %v432, 96
        %v446 = vpop.permute.xlu0 %445
        %449 = vrot.lane.b32.xlu0 %v427, 32
        %v450 = vpop.permute.xlu0 %449
        %451 = vrot.lane.b32.xlu0 %v432, 32
        %v452 = vpop.permute.xlu0 %451
        %v455 = vsel %vm353, %v444, %v450
        %v456 = vsel %vm353, %v446, %v452
        %v457 = vmul.f32 %v455, %v437
        %v458 = vmul.f32 %v456, %v438
        %v459 = vadd.f32 %v439, %v457
        %v460 = vadd.f32 %v440, %v458
        %v461 = vmul.f32 %v459, 0.125
        %v462 = vmul.f32 %v460, 0.125
        %465 = vrot.lane.b32.xlu0 %v435, 64
        %v466 = vpop.permute.xlu0 %465
        %467 = vrot.lane.b32.xlu0 %v436, 64
        %v468 = vpop.permute.xlu0 %467
        %v471 = vmul.f32 %v427, %v466
        %v472 = vmul.f32 %v432, %v468
        %v473 = vsel %vm353, %v450, %v444
        %v474 = vsel %vm353, %v452, %v446
        %v475 = vmul.f32 %v473, %v437
        %v476 = vmul.f32 %v474, %v438
        %479 = vrot.lane.b32.xlu0 %v475, 64
        %v480 = vpop.permute.xlu0 %479
        %481 = vrot.lane.b32.xlu0 %v476, 64
        %v482 = vpop.permute.xlu0 %481
        %v485 = vadd.f32 %v471, %v480
        %v486 = vadd.f32 %v472, %v482
        %489 = vrot.lane.b32.xlu0 %v485, 64
        %v490 = vpop.permute.xlu0 %489
        %491 = vrot.lane.b32.xlu0 %v486, 64
        %v492 = vpop.permute.xlu0 %491
        %vm493 = vcmask 523264
        %v495 = vsel %vm493, %v461, 0
        %v498 = vsel %vm493, %v462, 0
        %v500 = vsel %vm493, %v490, 0
        %v502 = vsel %vm493, %v492, 0
        %504 = vmatprep.subr.mxu0 0.0
        %505 = vmatpush1.xpose.msra.mxu0 %v500
        %506 = vmatprep.subr.mxu0 0.0
        %507 = vmatpush1.xpose.msra.mxu0 %v502
        %508 = vmatprep.subr.mxu0 0.0
        %509 = vmatpush1.xpose.msra.mxu0 0.0
        %510 = vmatprep.subr.mxu0 0.0
        %511 = vmatpush1.xpose.msra.mxu0 0.0
        %512 = vmatprep.subr.mxu0 0.0
        %513 = vmatpush1.xpose.msra.mxu0 0.0
        %514 = vmatprep.subr.mxu0 0.0
        %515 = vmatpush1.xpose.msra.mxu0 0.0
        %516 = vmatprep.subr.mxu0 0.0
        %517 = vmatpush1.xpose.msra.mxu0 0.0
        %518 = vmatprep.subr.mxu0 0.0
        %519 = vmatpush1.xpose.msra.mxu0 0.0
        %520 = vmatprep.subr.mxu0 0.0
        %521 = vmatpush1.xpose.msra.mxu0 0.0
        %522 = vmatprep.subr.mxu0 0.0
        %523 = vmatpush1.xpose.msra.mxu0 0.0
        %524 = vmatprep.subr.mxu0 0.0
        %525 = vmatpush1.xpose.msra.mxu0 0.0
        %526 = vmatprep.subr.mxu0 0.0
        %527 = vmatpush1.xpose.msra.mxu0 0.0
        %528 = vmatprep.subr.mxu0 0.0
        %529 = vmatpush1.xpose.msra.mxu0 0.0
        %530 = vmatprep.subr.mxu0 0.0
        %531 = vmatpush1.xpose.msra.mxu0 0.0
        %532 = vmatprep.subr.mxu0 0.0
        %533 = vmatpush1.xpose.msra.mxu0 0.0
        %534 = vmatprep.subr.mxu0 0.0
        %535 = vmatpush1.xpose.msra.mxu0 0.0
        %536 = vmatprep.subr.mxu0 0.0
        %537 = vmatpush1.xpose.msra.mxu0 0.0
        %538 = vmatprep.subr.mxu0 0.0
        %539 = vmatpush1.xpose.msra.mxu0 0.0
        %540 = vmatprep.subr.mxu0 0.0
        %541 = vmatpush1.xpose.msra.mxu0 0.0
        %542 = vmatprep.subr.mxu0 0.0
        %543 = vmatpush1.xpose.msra.mxu0 0.0
        %544 = vmatprep.subr.mxu0 0.0
        %545 = vmatpush1.xpose.msra.mxu0 0.0
        %546 = vmatprep.subr.mxu0 0.0
        %547 = vmatpush1.xpose.msra.mxu0 0.0
        %548 = vmatprep.subr.mxu0 0.0
        %549 = vmatpush1.xpose.msra.mxu0 0.0
        %550 = vmatprep.subr.mxu0 0.0
        %551 = vmatpush1.xpose.msra.mxu0 0.0
        %552 = vmatprep.subr.mxu0 0.0
        %553 = vmatpush1.xpose.msra.mxu0 0.0
        %554 = vmatprep.subr.mxu0 0.0
        %555 = vmatpush1.xpose.msra.mxu0 0.0
        %556 = vmatprep.subr.mxu0 0.0
        %557 = vmatpush1.xpose.msra.mxu0 0.0
        %558 = vmatprep.subr.mxu0 0.0
        %559 = vmatpush1.xpose.msra.mxu0 0.0
        %560 = vmatprep.subr.mxu0 0.0
        %561 = vmatpush1.xpose.msra.mxu0 0.0
        %562 = vmatprep.subr.mxu0 0.0
        %563 = vmatpush1.xpose.msra.mxu0 0.0
        %564 = vmatprep.subr.mxu0 0.0
        %565 = vmatpush1.xpose.msra.mxu0 0.0
        %566 = vmatprep.subr.mxu0 0.0
        %567 = vmatpush1.xpose.msra.mxu0 0.0
        %568 = vmatprep.mubr.f32.mxu0 0.0
        %569 = vmatmul.mubr.f32.gmra.mrb[0].mxu0 %v495
        %v570 = vpop.f32.mrb[0].mxu0
        %v571 = vadd.f32 0.0, %v570
        %v572 = vpop.f32.mrb[0].mxu0
        %573 = vmatprep.mubr.f32.mxu0 0.0
        %574 = vmatmul.mubr.f32.gmra.mrb[0].mxu0 %v498
        %v575 = vpop.f32.mrb[0].mxu0
        %v576 = vadd.f32 0.0, %v575
        %v577 = vpop.f32.mrb[0].mxu0
        %578 = vdwg.mxu0
        %vm579 = vcmask 130048
        %580 = vst.msk [vmem:[%s336] sm:$0xff] %vm579, %v571
        %581 = vst.msk [vmem:[%s336 + $0x8] sm:$0xff] %vm579, %v576
        %s582 = sand.u32 %s168, 1
        %s583 = scalar_lea.sflag [#allocation4], %s582
        %s584 = sand.u32 %s168, 1
        %s585 = smul.addr %s584, 16
        %s586 = scalar_lea.vmem [#allocation10], %s585
        // Predicated region
        $region57: #{tpu_custom_call.1} parent=39 // pred_check
          %p587 = pneg %p178
        $region58: #{tpu_custom_call.1} parent=39 // pred_check_branch
          %589 = sbr.rel (%p587) target = $region60
        $region59: #{tpu_custom_call.1} parent=39 // pred_region
          %s591 = ssub.s32 256, 256
          %592 = vsyncadd %s583, %s591
          %s593 = smul.addr %s31, 2
          %s594 = smul.addr %s30, 6
          %s595 = sadd.s32 %s593, %s594
          %s596 = smul.addr %s595, 128
          %s597 = scalar_lea.hbm %s5, %s596
          %s598 = sshll.u32 %s586, 4
          %s599 = int_to_ptr.vmem [resolvable:$true] %s598
          %604 = dma.vmem_to_hbm [thread:$0]  %s599, 256, %s597, %s583, 128, 128, 8
        $region60: #{tpu_custom_call.1} parent=39 // pred_fallthru
          _
      $region40: #{tpu_custom_call.1} parent=5 // pred_fallthru
        _
      %p605 = scmp.le.s32.totalorder 2, %s21
      // Predicated region
      $region61: #{tpu_custom_call.1} parent=5 // pred_check
        %p606 = pneg %p605
      $region62: #{tpu_custom_call.1} parent=5 // pred_check_branch
        %608 = sbr.rel (%p606) target = $region64
      $region63: #{tpu_custom_call.1} parent=5 // pred_region
        %s609 = ssub.s32 %s21, 2
        // Predicated region
        $region65: #{tpu_custom_call.1} parent=63 // pred_check
          %p610 = pneg %p184
        $region66: #{tpu_custom_call.1} parent=63 // pred_check_branch
          %612 = sbr.rel (%p610) target = $region68
        $region67: #{tpu_custom_call.1} parent=63 // pred_region
          %s613 = sand.u32 %s169, 1
          %s614 = scalar_lea.sflag [#allocation4], %s613
          %s615 = sand.u32 %s169, 1
          %s616 = smul.addr %s615, 16
          %s617 = scalar_lea.vmem [#allocation10], %s616
          %618 = dma.done %s614, 256
        $region68: #{tpu_custom_call.1} parent=63 // pred_fallthru
          _
      $region64: #{tpu_custom_call.1} parent=5 // pred_fallthru
        _
    $region6: #{tpu_custom_call.1} parent=1 // loop_footer
      %s25 = sadd.s32 1, %s21
    $region7: #{tpu_custom_call.1} parent=1 // loop_footer_branch
      %20 = sbr.rel target = $region3
    $region8: #{tpu_custom_call.1} parent=1 // loop_exit
      _
    %619 = vsyncpa [#allocation3], 1
    %s620 = scalar_lea.sflag [#allocation3], 1
    %621 = vsyncpa %s620, 1
    %622 = vsyncpa [#allocation6], 1
    %s623 = scalar_lea.sflag [#allocation6], 1
    %624 = vsyncpa %s623, 1
    %625 = vsyncpa [#allocation9], 1
    %626 = vsyncpa [#allocation4], 1
    %s627 = scalar_lea.sflag [#allocation4], 1
    %628 = vsyncpa %s627, 1

</llo_original>
